<compile_context>
chip_gen: v5e
topology: v5e:2x2
jax: 0.10.0
libtpu: 0.0.40
codegen_flags: <defaults>
</compile_context>

<pallas_src>
import functools

import jax
import jax.numpy as jnp
from jax.experimental import pallas as pl
from jax.experimental.pallas import tpu as pltpu


def _sigmoid_via_tanh(x):
    # sigmoid(x) == 0.5 * tanh(0.5 * x) + 0.5 : exactly one EUP (tanh-class)
    # op per element; avoids any exp + divide lowering of logistic.
    return 0.5 * jnp.tanh(0.5 * x) + 0.5


def _convlstm_kernel(x_ref, h_ref, c_ref, w_ref, hn_ref, cn_ref,
                     comb_ref, slab_ref, gates_ref,
                     *, H, W, hid, kh, kw, cx, cpad, nb):
    """One grid step = `nb` batch elements.

    x_ref:     (nb, cx,  H*W)  input, channel-major, lane-dense        (f32)
    h_ref:     (nb, hid, H*W)  h_cur                                   (f32)
    c_ref:     (nb, hid, H*W)  c_cur                                   (f32)
    w_ref:     (4*hid, kh*kw*cpad)  conv weight, transposed/flat; bias
               folded into the center-tap column of the "ones" row     (bf16)
    hn_ref:    (nb, hid, H*W)  h_next                                  (f32)
    cn_ref:    (nb, hid, H*W)  c_next                                  (f32)
    comb_ref:  (cpad, L)       scratch: zero-padded [x; h] image, flat (f32)
    slab_ref:  (kh*kw*cpad, nb*H*W) scratch: fused im2col slab         (bf16)
    gates_ref: (4*hid, nb*H*W) scratch: matmul output                  (f32)
    """
    M = H * W
    ph, pw = kh // 2, kw // 2
    off = pw + ph * W          # flat position of interior pixel (0, 0)
    cin = cx + hid             # real channels; row `cin` is the bias "ones" row

    # ---- per-grid-step init, hoisted out of the batch loop:
    # halo lanes / padded-channel rows stay zero across all nb iterations; the
    # interior of rows [0:cin) is fully overwritten for every batch element.
    # (Not guarded by program_id == 0: under megacore grid sharding a core may
    # never see step 0, so each grid step initializes its own scratch.)
    comb_ref[...] = jnp.zeros_like(comb_ref)
    comb_ref[cin:cin + 1, off:off + M] = jnp.ones((1, M), dtype=comb_ref.dtype)

    # Column-validity masks for the W boundary of "same" padding, one per dx.
    # Hoisted out of all loops (broadcasts are not CSE'd by JAX).
    col = jax.lax.broadcasted_iota(jnp.int32, (cpad, M), 1) % W
    col_masks = []
    for dx in range(kw):
        shift = dx - pw
        if shift < 0:
            col_masks.append(col >= -shift)
        elif shift > 0:
            col_masks.append(col < W - shift)
        else:
            col_masks.append(None)          # center column never wraps

    # ---- phase 1: build the fused im2col slab for all nb batch elements.
    #      Tap (dy, dx) is a flat lane shift of dy*W + dx of the padded image
    #      plus a per-dx column mask; the H boundary is handled by the zero
    #      halo rows already present in comb_ref.
    for b in range(nb):                      # nb is small (<= 8 by default)
        comb_ref[0:cx, off:off + M] = x_ref[b]
        comb_ref[cx:cin, off:off + M] = h_ref[b]
        for t in range(kh * kw):
            dy, dx = t // kw, t % kw
            d = dy * W + dx
            src = comb_ref[:, d:d + M]                       # (cpad, M) f32
            m = col_masks[dx]
            if m is not None:
                src = jnp.where(m, src, jnp.zeros_like(src))
            # cpad % 16 == 0  ->  pack-aligned bf16 16-row stores.
            slab_ref[t * cpad:(t + 1) * cpad, b * M:(b + 1) * M] = (
                src.astype(slab_ref.dtype))

    # ---- phase 2: ONE MXU matmul for the whole grid step (bf16 operands,
    #      f32 accumulation); bias is folded in via the "ones" row.  Output is
    #      already transposed: (batch, H*W) sits on the lane axis.
    gates_ref[...] = jnp.dot(w_ref[...], slab_ref[...],
                             preferred_element_type=jnp.float32)

    # ---- phase 3: LSTM gate math in f32 (PyTorch split order i, f, o, g),
    #      sigmoids as single-tanh EUP ops, lane-dense stores per element.
    for b in range(nb):
        g_b = gates_ref[:, b * M:(b + 1) * M]                # (4*hid, M) f32
        i = _sigmoid_via_tanh(g_b[0 * hid:1 * hid, :])
        f = _sigmoid_via_tanh(g_b[1 * hid:2 * hid, :])
        o = _sigmoid_via_tanh(g_b[2 * hid:3 * hid, :])
        g = jnp.tanh(g_b[3 * hid:4 * hid, :])

        c_next = f * c_ref[b] + i * g                        # f32 accumulation
        h_next = o * jnp.tanh(c_next)

        cn_ref[b] = c_next.astype(cn_ref.dtype)              # lane-dense stores
        hn_ref[b] = h_next.astype(hn_ref.dtype)


def _pick_batch_block(N, requested):
    """Default batch_block: big enough to amortize per-step overhead and feed
    the MXU a long N (single-TC v5e/v6e), while keeping the grid even and >= 2
    so the 'parallel' axis balances both v7x TensorCores."""
    if requested is not None:
        return requested
    best, best_key = 1, None
    for nb in range(1, min(N, 8) + 1):
        if N % nb:
            continue
        g = N // nb
        key = (g >= 2, g % 2 == 0, nb)
        if best_key is None or key > best_key:
            best, best_key = nb, key
    return best


def conv_lstm_cell(x, h_cur, c_cur, weight, bias, kernel_size, *,
                   batch_block=None):
    """ConvLSTMCell forward (Pallas TPU).

    x:      (N, input_dim, H, W)   NCHW, same as the PyTorch module
    h_cur:  (N, hidden_dim, H, W)
    c_cur:  (N, hidden_dim, H, W)
    weight: (4*hidden_dim, input_dim + hidden_dim, kh, kw)   nn.Conv2d OIHW
    bias:   (4*hidden_dim,)
    Returns (h_next, c_next) in NCHW.
    """
    kh, kw = kernel_size
    assert kh % 2 == 1 and kw % 2 == 1, "module's 'same' padding implies odd kernel"
    N, cx, H, W = x.shape
    hid = h_cur.shape[1]
    cin = cx + hid
    # +1 spare row for the folded bias; round to 16 so every bf16 slab write
    # lands on packed-sublane (16-row) boundaries for ANY cin.
    cpad = -(-(cin + 1) // 16) * 16
    K = kh * kw * cpad
    M = H * W
    ph, pw = kh // 2, kw // 2
    L = 2 * pw + (H + 2 * ph) * W         # flat padded-image length

    nb = _pick_batch_block(N, batch_block)
    assert N % nb == 0, "batch_block must divide N"
    grid = (N // nb,)

    # Tiny weight shuffle (negligible): OIHW -> (4*hid, K), K ordered
    # (dy, dx, channel) to match the slab; zero columns for padded channels;
    # bias folded into the center-tap column of the "ones" row (row index cin).
    w_t = jnp.transpose(weight, (0, 2, 3, 1))                    # (4hid, kh, kw, cin)
    w_t = jnp.pad(w_t, ((0, 0), (0, 0), (0, 0), (0, cpad - cin)))
    w_t = w_t.at[:, ph, pw, cin].set(bias)
    w_t = w_t.reshape(4 * hid, K).astype(jnp.bfloat16)

    # Free contiguous reshapes (no transposes, no HBM copies of substance):
    # channel-major with a lane-dense H*W minor axis.
    x_f = x.reshape(N, cx, M)
    h_f = h_cur.reshape(N, hid, M)
    c_f = c_cur.reshape(N, hid, M)

    kern = functools.partial(_convlstm_kernel, H=H, W=W, hid=hid, kh=kh, kw=kw,
                             cx=cx, cpad=cpad, nb=nb)

    # Rough VMEM budget: double-buffered blocks + scratch.  Only raise the
    # scoped limit when the budget would not fit the smallest default (v5e).
    blk_bytes = (4 * (nb * cx * M + 2 * nb * hid * M)      # x, h, c blocks (f32)
                 + 2 * (4 * hid * K)                        # weight (bf16)
                 + 4 * (2 * nb * hid * M))                  # h_next, c_next blocks
    scratch_bytes = 4 * cpad * L + 2 * K * nb * M + 4 * (4 * hid * nb * M)
    vmem_need = 2 * blk_bytes + scratch_bytes
    cparams = dict(dimension_semantics=("parallel",))
    if vmem_need > (12 << 20):
        # TODO(synk): for large H*W, tile H with a (kh-1)-row halo instead of
        # growing this limit (v7x has only 64 MiB VMEM vs 128 MiB on v5e/v6e).
        cparams["vmem_limit_bytes"] = int(min(vmem_need * 5 // 4 + (2 << 20),
                                              112 << 20))

    h_next, c_next = pl.pallas_call(
        kern,
        out_shape=(jax.ShapeDtypeStruct((N, hid, M), x.dtype),
                   jax.ShapeDtypeStruct((N, hid, M), x.dtype)),
        grid_spec=pltpu.PrefetchScalarGridSpec(
            num_scalar_prefetch=0,
            grid=grid,
            in_specs=[
                pl.BlockSpec((nb, cx, M), lambda n: (n, 0, 0)),
                pl.BlockSpec((nb, hid, M), lambda n: (n, 0, 0)),
                pl.BlockSpec((nb, hid, M), lambda n: (n, 0, 0)),
                pl.BlockSpec((4 * hid, K), lambda n: (0, 0)),
            ],
            out_specs=[
                pl.BlockSpec((nb, hid, M), lambda n: (n, 0, 0)),
                pl.BlockSpec((nb, hid, M), lambda n: (n, 0, 0)),
            ],
            scratch_shapes=[
                pltpu.VMEM((cpad, L), jnp.float32),          # padded [x; h] image
                pltpu.VMEM((K, nb * M), jnp.bfloat16),       # fused im2col slab
                pltpu.VMEM((4 * hid, nb * M), jnp.float32),  # gates
            ],
        ),
        compiler_params=pltpu.CompilerParams(**cparams),
    )(x_f, h_f, c_f, w_t)

    # Free reshapes straight back to NCHW (no output transposes).
    return h_next.reshape(N, hid, H, W), c_next.reshape(N, hid, H, W)


def _reference(x, h_cur, c_cur, weight, bias, kernel_size):
    """Pure-JAX f32 reference with PyTorch ConvLSTMCell semantics."""
    kh, kw = kernel_size
    combined = jnp.concatenate([x, h_cur], axis=1)
    out = jax.lax.conv_general_dilated(
        combined, weight, window_strides=(1, 1),
        padding=((kh // 2, kh // 2), (kw // 2, kw // 2)),
        dimension_numbers=("NCHW", "OIHW", "NCHW"))
    out = out + bias[None, :, None, None]
    cc_i, cc_f, cc_o, cc_g = jnp.split(out, 4, axis=1)
    i = jax.nn.sigmoid(cc_i)
    f = jax.nn.sigmoid(cc_f)
    o = jax.nn.sigmoid(cc_o)
    g = jnp.tanh(cc_g)
    c_next = f * c_cur + i * g
    h_next = o * jnp.tanh(c_next)
    return h_next, c_next


if __name__ == "__main__":
    kernel_size = (3, 3)
    input_dim, hidden_dim = 4, 8
    H, W = 16, 16
    cin = input_dim + hidden_dim

    key = jax.random.PRNGKey(0)
    k1, k2, k3, k4, k5, k6, k7, k8 = jax.random.split(key, 8)

    # PyTorch-style Conv2d init, native OIHW layout.
    fan_in = cin * kernel_size[0] * kernel_size[1]
    bound = 1.0 / (fan_in ** 0.5)
    weight = jax.random.uniform(
        k4, (4 * hidden_dim, cin, kernel_size[0], kernel_size[1]),
        jnp.float32, -bound, bound)
    bias = jax.random.uniform(k5, (4 * hidden_dim,), jnp.float32, -bound, bound)

    # Case 1: module-sized example (N=2; auto batch_block -> nb=1, grid=2).
    N = 2
    x = jax.random.normal(k1, (N, input_dim, H, W), jnp.float32)
    h_cur = jax.random.normal(k2, (N, hidden_dim, H, W), jnp.float32)
    c_cur = jax.random.normal(k3, (N, hidden_dim, H, W), jnp.float32)

    h_next, c_next = conv_lstm_cell(x, h_cur, c_cur, weight, bias, kernel_size)
    jax.block_until_ready((h_next, c_next))

    h_exp, c_exp = _reference(x, h_cur, c_cur, weight, bias, kernel_size)
    # bf16 MXU operands (f32 accumulation) vs f32 reference -> loosened tolerance.
    assert jnp.allclose(h_next, h_exp, atol=5e-2, rtol=5e-2)
    assert jnp.allclose(c_next, c_exp, atol=5e-2, rtol=5e-2)

    # Case 2: exercise the fused multi-batch MXU path (nb=4, grid=2).
    N2 = 8
    x2 = jax.random.normal(k6, (N2, input_dim, H, W), jnp.float32)
    h2 = jax.random.normal(k7, (N2, hidden_dim, H, W), jnp.float32)
    c2 = jax.random.normal(k8, (N2, hidden_dim, H, W), jnp.float32)

    h_next2, c_next2 = conv_lstm_cell(x2, h2, c2, weight, bias, kernel_size,
                                      batch_block=4)
    jax.block_until_ready((h_next2, c_next2))

    h_exp2, c_exp2 = _reference(x2, h2, c2, weight, bias, kernel_size)
    assert jnp.allclose(h_next2, h_exp2, atol=5e-2, rtol=5e-2)
    assert jnp.allclose(c_next2, c_exp2, atol=5e-2, rtol=5e-2)

    print("KERNEL_OK")
</pallas_src>

<mosaic_0001>
module attributes {stable_mosaic.version = 11 : i64} {
  func.func @_convlstm_kernel(%arg0: i32, %arg1: memref<1x4x256xf32, #tpu.memory_space<vmem>>, %arg2: memref<1x8x256xf32, #tpu.memory_space<vmem>>, %arg3: memref<1x8x256xf32, #tpu.memory_space<vmem>>, %arg4: memref<32x144xbf16, #tpu.memory_space<vmem>>, %arg5: memref<1x8x256xf32, #tpu.memory_space<vmem>>, %arg6: memref<1x8x256xf32, #tpu.memory_space<vmem>>, %arg7: memref<16x290xf32, #tpu.memory_space<vmem>>, %arg8: memref<144x256xbf16, #tpu.memory_space<vmem>>, %arg9: memref<32x256xf32, #tpu.memory_space<vmem>>) attributes {dimension_semantics = [#tpu.dimension_semantics<parallel>], iteration_bounds = array<i64: 2>, scalar_prefetch = 0 : i64, scratch_operands = 3 : i64, tpu.core_type = #tpu.core_type<tc>, window_params = [{transform_indices = @transform_0, window_bounds = array<i64: 1, 4, 256>}, {transform_indices = @transform_1, window_bounds = array<i64: 1, 8, 256>}, {transform_indices = @transform_2, window_bounds = array<i64: 1, 8, 256>}, {pipeline_mode = #tpu.pipeline_mode<synchronous>, transform_indices = @transform_3, window_bounds = array<i64: 32, 144>}, {transform_indices = @transform_4, window_bounds = array<i64: 1, 8, 256>}, {transform_indices = @transform_5, window_bounds = array<i64: 1, 8, 256>}]} {
    %cst = arith.constant 0.000000e+00 : f32
    %0 = vector.broadcast %cst : f32 to vector<16x290xf32>
    %c0 = arith.constant 0 : index
    %c0_0 = arith.constant 0 : index
    %1 = vector.load %arg7[%c0, %c0_0] : memref<16x290xf32, #tpu.memory_space<vmem>>, vector<16x290xf32>
    tpu.vector_store %arg7[%c0, %c0_0], %0 {strides = array<i32>} : memref<16x290xf32, #tpu.memory_space<vmem>>, vector<16x290xf32>,
    %cst_1 = arith.constant 1.000000e+00 : f32
    %2 = vector.broadcast %cst_1 : f32 to vector<1x256xf32>
    %c12 = arith.constant 12 : index
    %c17 = arith.constant 17 : index
    %3 = vector.load %arg7[%c12, %c17] : memref<16x290xf32, #tpu.memory_space<vmem>>, vector<1x256xf32>
    tpu.vector_store %arg7[%c12, %c17], %2 {strides = array<i32>} : memref<16x290xf32, #tpu.memory_space<vmem>>, vector<1x256xf32>,
    %4 = tpu.iota {dimensions = array<i32: 1>} : vector<16x256xi32>
    %c16_i32 = arith.constant 16 : i32
    %c0_i32 = arith.constant 0 : i32
    %5 = arith.cmpi eq, %c16_i32, %c0_i32 : i32
    %c1_i32 = arith.constant 1 : i32
    %6 = arith.select %5, %c1_i32, %c16_i32 : i32
    %7 = vector.broadcast %6 : i32 to vector<16x256xi32>
    %8 = arith.remsi %4, %7 : vector<16x256xi32>
    %c0_i32_2 = arith.constant 0 : i32
    %9 = vector.broadcast %c0_i32_2 : i32 to vector<16x256xi32>
    %10 = arith.cmpi ne, %8, %9 : vector<16x256xi32>
    %c0_i32_3 = arith.constant 0 : i32
    %11 = vector.broadcast %c0_i32_3 : i32 to vector<16x256xi32>
    %12 = arith.cmpi slt, %8, %11 : vector<16x256xi32>
    %c0_i32_4 = arith.constant 0 : i32
    %13 = arith.cmpi slt, %6, %c0_i32_4 : i32
    %14 = vector.broadcast %13 : i1 to vector<16x256xi1>
    %15 = vector.broadcast %14 : vector<16x256xi1> to vector<16x256xi1>
    %16 = arith.xori %12, %15 : vector<16x256xi1>
    %17 = arith.andi %16, %10 : vector<16x256xi1>
    %18 = vector.broadcast %6 : i32 to vector<16x256xi32>
    %19 = arith.addi %8, %18 : vector<16x256xi32>
    %20 = arith.select %17, %19, %8 : vector<16x256xi1>, vector<16x256xi32>
    %c1_i32_5 = arith.constant 1 : i32
    %21 = vector.broadcast %c1_i32_5 : i32 to vector<16x256xi32>
    %22 = arith.cmpi sge, %20, %21 : vector<16x256xi32>
    %c15_i32 = arith.constant 15 : i32
    %23 = vector.broadcast %c15_i32 : i32 to vector<16x256xi32>
    %24 = arith.cmpi slt, %20, %23 : vector<16x256xi32>
    %c0_6 = arith.constant 0 : index
    %c0_7 = arith.constant 0 : index
    %c0_8 = arith.constant 0 : index
    %25 = vector.load %arg1[%c0_6, %c0_7, %c0_8] : memref<1x4x256xf32, #tpu.memory_space<vmem>>, vector<1x4x256xf32>
    %26 = vector.shape_cast %25 : vector<1x4x256xf32> to vector<4x256xf32>
    %c0_9 = arith.constant 0 : index
    %c17_10 = arith.constant 17 : index
    %27 = vector.load %arg7[%c0_9, %c17_10] : memref<16x290xf32, #tpu.memory_space<vmem>>, vector<4x256xf32>
    tpu.vector_store %arg7[%c0_9, %c17_10], %26 {strides = array<i32>} : memref<16x290xf32, #tpu.memory_space<vmem>>, vector<4x256xf32>,
    %c0_11 = arith.constant 0 : index
    %c0_12 = arith.constant 0 : index
    %c0_13 = arith.constant 0 : index
    %28 = vector.load %arg2[%c0_11, %c0_12, %c0_13] : memref<1x8x256xf32, #tpu.memory_space<vmem>>, vector<1x8x256xf32>
    %29 = vector.shape_cast %28 : vector<1x8x256xf32> to vector<8x256xf32>
    %c4 = arith.constant 4 : index
    %c17_14 = arith.constant 17 : index
    %30 = vector.load %arg7[%c4, %c17_14] : memref<16x290xf32, #tpu.memory_space<vmem>>, vector<8x256xf32>
    tpu.vector_store %arg7[%c4, %c17_14], %29 {strides = array<i32>} : memref<16x290xf32, #tpu.memory_space<vmem>>, vector<8x256xf32>,
    %c0_15 = arith.constant 0 : index
    %c0_16 = arith.constant 0 : index
    %31 = vector.load %arg7[%c0_15, %c0_16] : memref<16x290xf32, #tpu.memory_space<vmem>>, vector<16x256xf32>
    %cst_17 = arith.constant 0.000000e+00 : f32
    %32 = vector.broadcast %cst_17 : f32 to vector<16x256xf32>
    %33 = arith.select %22, %31, %32 : vector<16x256xi1>, vector<16x256xf32>
    %34 = arith.truncf %33 : vector<16x256xf32> to vector<16x256xbf16>
    %c0_18 = arith.constant 0 : index
    %c0_19 = arith.constant 0 : index
    %35 = vector.load %arg8[%c0_18, %c0_19] : memref<144x256xbf16, #tpu.memory_space<vmem>>, vector<16x256xbf16>
    tpu.vector_store %arg8[%c0_18, %c0_19], %34 {strides = array<i32>} : memref<144x256xbf16, #tpu.memory_space<vmem>>, vector<16x256xbf16>,
    %c0_20 = arith.constant 0 : index
    %c1 = arith.constant 1 : index
    %36 = vector.load %arg7[%c0_20, %c1] : memref<16x290xf32, #tpu.memory_space<vmem>>, vector<16x256xf32>
    %37 = arith.truncf %36 : vector<16x256xf32> to vector<16x256xbf16>
    %c16 = arith.constant 16 : index
    %c0_21 = arith.constant 0 : index
    %38 = vector.load %arg8[%c16, %c0_21] : memref<144x256xbf16, #tpu.memory_space<vmem>>, vector<16x256xbf16>
    tpu.vector_store %arg8[%c16, %c0_21], %37 {strides = array<i32>} : memref<144x256xbf16, #tpu.memory_space<vmem>>, vector<16x256xbf16>,
    %c0_22 = arith.constant 0 : index
    %c2 = arith.constant 2 : index
    %39 = vector.load %arg7[%c0_22, %c2] : memref<16x290xf32, #tpu.memory_space<vmem>>, vector<16x256xf32>
    %cst_23 = arith.constant 0.000000e+00 : f32
    %40 = vector.broadcast %cst_23 : f32 to vector<16x256xf32>
    %41 = arith.select %24, %39, %40 : vector<16x256xi1>, vector<16x256xf32>
    %42 = arith.truncf %41 : vector<16x256xf32> to vector<16x256xbf16>
    %c32 = arith.constant 32 : index
    %c0_24 = arith.constant 0 : index
    %43 = vector.load %arg8[%c32, %c0_24] : memref<144x256xbf16, #tpu.memory_space<vmem>>, vector<16x256xbf16>
    tpu.vector_store %arg8[%c32, %c0_24], %42 {strides = array<i32>} : memref<144x256xbf16, #tpu.memory_space<vmem>>, vector<16x256xbf16>,
    %c0_25 = arith.constant 0 : index
    %c16_26 = arith.constant 16 : index
    %44 = vector.load %arg7[%c0_25, %c16_26] : memref<16x290xf32, #tpu.memory_space<vmem>>, vector<16x256xf32>
    %cst_27 = arith.constant 0.000000e+00 : f32
    %45 = vector.broadcast %cst_27 : f32 to vector<16x256xf32>
    %46 = arith.select %22, %44, %45 : vector<16x256xi1>, vector<16x256xf32>
    %47 = arith.truncf %46 : vector<16x256xf32> to vector<16x256xbf16>
    %c48 = arith.constant 48 : index
    %c0_28 = arith.constant 0 : index
    %48 = vector.load %arg8[%c48, %c0_28] : memref<144x256xbf16, #tpu.memory_space<vmem>>, vector<16x256xbf16>
    tpu.vector_store %arg8[%c48, %c0_28], %47 {strides = array<i32>} : memref<144x256xbf16, #tpu.memory_space<vmem>>, vector<16x256xbf16>,
    %c0_29 = arith.constant 0 : index
    %c17_30 = arith.constant 17 : index
    %49 = vector.load %arg7[%c0_29, %c17_30] : memref<16x290xf32, #tpu.memory_space<vmem>>, vector<16x256xf32>
    %50 = arith.truncf %49 : vector<16x256xf32> to vector<16x256xbf16>
    %c64 = arith.constant 64 : index
    %c0_31 = arith.constant 0 : index
    %51 = vector.load %arg8[%c64, %c0_31] : memref<144x256xbf16, #tpu.memory_space<vmem>>, vector<16x256xbf16>
    tpu.vector_store %arg8[%c64, %c0_31], %50 {strides = array<i32>} : memref<144x256xbf16, #tpu.memory_space<vmem>>, vector<16x256xbf16>,
    %c0_32 = arith.constant 0 : index
    %c18 = arith.constant 18 : index
    %52 = vector.load %arg7[%c0_32, %c18] : memref<16x290xf32, #tpu.memory_space<vmem>>, vector<16x256xf32>
    %cst_33 = arith.constant 0.000000e+00 : f32
    %53 = vector.broadcast %cst_33 : f32 to vector<16x256xf32>
    %54 = arith.select %24, %52, %53 : vector<16x256xi1>, vector<16x256xf32>
    %55 = arith.truncf %54 : vector<16x256xf32> to vector<16x256xbf16>
    %c80 = arith.constant 80 : index
    %c0_34 = arith.constant 0 : index
    %56 = vector.load %arg8[%c80, %c0_34] : memref<144x256xbf16, #tpu.memory_space<vmem>>, vector<16x256xbf16>
    tpu.vector_store %arg8[%c80, %c0_34], %55 {strides = array<i32>} : memref<144x256xbf16, #tpu.memory_space<vmem>>, vector<16x256xbf16>,
    %c0_35 = arith.constant 0 : index
    %c32_36 = arith.constant 32 : index
    %57 = vector.load %arg7[%c0_35, %c32_36] : memref<16x290xf32, #tpu.memory_space<vmem>>, vector<16x256xf32>
    %cst_37 = arith.constant 0.000000e+00 : f32
    %58 = vector.broadcast %cst_37 : f32 to vector<16x256xf32>
    %59 = arith.select %22, %57, %58 : vector<16x256xi1>, vector<16x256xf32>
    %60 = arith.truncf %59 : vector<16x256xf32> to vector<16x256xbf16>
    %c96 = arith.constant 96 : index
    %c0_38 = arith.constant 0 : index
    %61 = vector.load %arg8[%c96, %c0_38] : memref<144x256xbf16, #tpu.memory_space<vmem>>, vector<16x256xbf16>
    tpu.vector_store %arg8[%c96, %c0_38], %60 {strides = array<i32>} : memref<144x256xbf16, #tpu.memory_space<vmem>>, vector<16x256xbf16>,
    %c0_39 = arith.constant 0 : index
    %c33 = arith.constant 33 : index
    %62 = vector.load %arg7[%c0_39, %c33] : memref<16x290xf32, #tpu.memory_space<vmem>>, vector<16x256xf32>
    %63 = arith.truncf %62 : vector<16x256xf32> to vector<16x256xbf16>
    %c112 = arith.constant 112 : index
    %c0_40 = arith.constant 0 : index
    %64 = vector.load %arg8[%c112, %c0_40] : memref<144x256xbf16, #tpu.memory_space<vmem>>, vector<16x256xbf16>
    tpu.vector_store %arg8[%c112, %c0_40], %63 {strides = array<i32>} : memref<144x256xbf16, #tpu.memory_space<vmem>>, vector<16x256xbf16>,
    %c0_41 = arith.constant 0 : index
    %c34 = arith.constant 34 : index
    %65 = vector.load %arg7[%c0_41, %c34] : memref<16x290xf32, #tpu.memory_space<vmem>>, vector<16x256xf32>
    %cst_42 = arith.constant 0.000000e+00 : f32
    %66 = vector.broadcast %cst_42 : f32 to vector<16x256xf32>
    %67 = arith.select %24, %65, %66 : vector<16x256xi1>, vector<16x256xf32>
    %68 = arith.truncf %67 : vector<16x256xf32> to vector<16x256xbf16>
    %c128 = arith.constant 128 : index
    %c0_43 = arith.constant 0 : index
    %69 = vector.load %arg8[%c128, %c0_43] : memref<144x256xbf16, #tpu.memory_space<vmem>>, vector<16x256xbf16>
    tpu.vector_store %arg8[%c128, %c0_43], %68 {strides = array<i32>} : memref<144x256xbf16, #tpu.memory_space<vmem>>, vector<16x256xbf16>,
    %c0_44 = arith.constant 0 : index
    %c0_45 = arith.constant 0 : index
    %70 = vector.load %arg4[%c0_44, %c0_45] : memref<32x144xbf16, #tpu.memory_space<vmem>>, vector<32x144xbf16>
    %c0_46 = arith.constant 0 : index
    %c0_47 = arith.constant 0 : index
    %71 = vector.load %arg8[%c0_46, %c0_47] : memref<144x256xbf16, #tpu.memory_space<vmem>>, vector<144x256xbf16>
    %cst_48 = arith.constant dense<0.000000e+00> : vector<32x256xf32>
    %72 = tpu.matmul %70, %71, %cst_48 {dimension_numbers = #tpu.dot_dimension_numbers<[1], [0], [0], [1], [0, 0, 1, 1], [], []>} : vector<32x144xbf16>, vector<144x256xbf16>, vector<32x256xf32> -> vector<32x256xf32>
    %c0_49 = arith.constant 0 : index
    %c0_50 = arith.constant 0 : index
    %73 = vector.load %arg9[%c0_49, %c0_50] : memref<32x256xf32, #tpu.memory_space<vmem>>, vector<32x256xf32>
    tpu.vector_store %arg9[%c0_49, %c0_50], %72 {strides = array<i32>} : memref<32x256xf32, #tpu.memory_space<vmem>>, vector<32x256xf32>,
    %c0_51 = arith.constant 0 : index
    %c0_52 = arith.constant 0 : index
    %74 = vector.load %arg9[%c0_51, %c0_52] : memref<32x256xf32, #tpu.memory_space<vmem>>, vector<32x256xf32>
    %75 = vector.extract_strided_slice %74 {offsets = [0, 0], sizes = [8, 256], strides = [1, 1]} : vector<32x256xf32> to vector<8x256xf32>
    %cst_53 = arith.constant 5.000000e-01 : f32
    %76 = vector.broadcast %cst_53 : f32 to vector<8x256xf32>
    %77 = arith.mulf %76, %75 : vector<8x256xf32>
    %78 = math.tanh %77 : vector<8x256xf32>
    %cst_54 = arith.constant 5.000000e-01 : f32
    %79 = vector.broadcast %cst_54 : f32 to vector<8x256xf32>
    %80 = arith.mulf %79, %78 : vector<8x256xf32>
    %cst_55 = arith.constant 5.000000e-01 : f32
    %81 = vector.broadcast %cst_55 : f32 to vector<8x256xf32>
    %82 = arith.addf %80, %81 : vector<8x256xf32>
    %83 = vector.extract_strided_slice %74 {offsets = [8, 0], sizes = [8, 256], strides = [1, 1]} : vector<32x256xf32> to vector<8x256xf32>
    %cst_56 = arith.constant 5.000000e-01 : f32
    %84 = vector.broadcast %cst_56 : f32 to vector<8x256xf32>
    %85 = arith.mulf %84, %83 : vector<8x256xf32>
    %86 = math.tanh %85 : vector<8x256xf32>
    %cst_57 = arith.constant 5.000000e-01 : f32
    %87 = vector.broadcast %cst_57 : f32 to vector<8x256xf32>
    %88 = arith.mulf %87, %86 : vector<8x256xf32>
    %cst_58 = arith.constant 5.000000e-01 : f32
    %89 = vector.broadcast %cst_58 : f32 to vector<8x256xf32>
    %90 = arith.addf %88, %89 : vector<8x256xf32>
    %91 = vector.extract_strided_slice %74 {offsets = [16, 0], sizes = [8, 256], strides = [1, 1]} : vector<32x256xf32> to vector<8x256xf32>
    %cst_59 = arith.constant 5.000000e-01 : f32
    %92 = vector.broadcast %cst_59 : f32 to vector<8x256xf32>
    %93 = arith.mulf %92, %91 : vector<8x256xf32>
    %94 = math.tanh %93 : vector<8x256xf32>
    %cst_60 = arith.constant 5.000000e-01 : f32
    %95 = vector.broadcast %cst_60 : f32 to vector<8x256xf32>
    %96 = arith.mulf %95, %94 : vector<8x256xf32>
    %cst_61 = arith.constant 5.000000e-01 : f32
    %97 = vector.broadcast %cst_61 : f32 to vector<8x256xf32>
    %98 = arith.addf %96, %97 : vector<8x256xf32>
    %99 = vector.extract_strided_slice %74 {offsets = [24, 0], sizes = [8, 256], strides = [1, 1]} : vector<32x256xf32> to vector<8x256xf32>
    %100 = math.tanh %99 : vector<8x256xf32>
    %c0_62 = arith.constant 0 : index
    %c0_63 = arith.constant 0 : index
    %c0_64 = arith.constant 0 : index
    %101 = vector.load %arg3[%c0_62, %c0_63, %c0_64] : memref<1x8x256xf32, #tpu.memory_space<vmem>>, vector<1x8x256xf32>
    %102 = vector.shape_cast %101 : vector<1x8x256xf32> to vector<8x256xf32>
    %103 = arith.mulf %90, %102 : vector<8x256xf32>
    %104 = arith.mulf %82, %100 : vector<8x256xf32>
    %105 = arith.addf %103, %104 : vector<8x256xf32>
    %106 = math.tanh %105 : vector<8x256xf32>
    %107 = arith.mulf %98, %106 : vector<8x256xf32>
    %c0_65 = arith.constant 0 : index
    %c0_66 = arith.constant 0 : index
    %c0_67 = arith.constant 0 : index
    %108 = vector.load %arg6[%c0_65, %c0_66, %c0_67] : memref<1x8x256xf32, #tpu.memory_space<vmem>>, vector<1x8x256xf32>
    %109 = vector.shape_cast %108 : vector<1x8x256xf32> to vector<8x256xf32>
    %110 = vector.shape_cast %105 : vector<8x256xf32> to vector<1x8x256xf32>
    tpu.vector_store %arg6[%c0_65, %c0_66, %c0_67], %110 {strides = array<i32>} : memref<1x8x256xf32, #tpu.memory_space<vmem>>, vector<1x8x256xf32>,
    %c0_68 = arith.constant 0 : index
    %c0_69 = arith.constant 0 : index
    %c0_70 = arith.constant 0 : index
    %111 = vector.load %arg5[%c0_68, %c0_69, %c0_70] : memref<1x8x256xf32, #tpu.memory_space<vmem>>, vector<1x8x256xf32>
    %112 = vector.shape_cast %111 : vector<1x8x256xf32> to vector<8x256xf32>
    %113 = vector.shape_cast %107 : vector<8x256xf32> to vector<1x8x256xf32>
    tpu.vector_store %arg5[%c0_68, %c0_69, %c0_70], %113 {strides = array<i32>} : memref<1x8x256xf32, #tpu.memory_space<vmem>>, vector<1x8x256xf32>,
    return
  }
  func.func @transform_0(%arg0: i32) -> (i32, i32, i32) {
    %c0_i32 = arith.constant 0 : i32
    %c0_i32_0 = arith.constant 0 : i32
    %c0_i32_1 = arith.constant 0 : i32
    return %arg0, %c0_i32, %c0_i32_0 : i32, i32, i32
  }
  func.func @transform_1(%arg0: i32) -> (i32, i32, i32) {
    %c0_i32 = arith.constant 0 : i32
    %c0_i32_0 = arith.constant 0 : i32
    %c0_i32_1 = arith.constant 0 : i32
    return %arg0, %c0_i32, %c0_i32_0 : i32, i32, i32
  }
  func.func @transform_2(%arg0: i32) -> (i32, i32, i32) {
    %c0_i32 = arith.constant 0 : i32
    %c0_i32_0 = arith.constant 0 : i32
    %c0_i32_1 = arith.constant 0 : i32
    return %arg0, %c0_i32, %c0_i32_0 : i32, i32, i32
  }
  func.func @transform_3(%arg0: i32) -> (i32, i32) {
    %c0_i32 = arith.constant 0 : i32
    %c0_i32_0 = arith.constant 0 : i32
    %c0_i32_1 = arith.constant 0 : i32
    return %c0_i32, %c0_i32_0 : i32, i32
  }
  func.func @transform_4(%arg0: i32) -> (i32, i32, i32) {
    %c0_i32 = arith.constant 0 : i32
    %c0_i32_0 = arith.constant 0 : i32
    %c0_i32_1 = arith.constant 0 : i32
    return %arg0, %c0_i32, %c0_i32_0 : i32, i32, i32
  }
  func.func @transform_5(%arg0: i32) -> (i32, i32, i32) {
    %c0_i32 = arith.constant 0 : i32
    %c0_i32_0 = arith.constant 0 : i32
    %c0_i32_1 = arith.constant 0 : i32
    return %arg0, %c0_i32, %c0_i32_0 : i32, i32, i32
  }
}

</mosaic_0001>

<llo_original>
// kernel: tpu_custom_call.1
$region0: #{tpu_custom_call.1}
  #allocation0 [shape = 'u32[]', space=smem, size = 0x4, offset = 0x4, fixed_abs, tag = 'smem constant byte address 0x4 - core index']
  #allocation1 [shape = 'u32[72,128]{1,0:T(1,128)}', space=vmem, size = 0x9000, scoped, tag = 'internal scratch']
  #allocation2 [shape = 'f32[16,290]{1,0:T(8,128)}', space=vmem, size = 0x6000, scoped, tag = 'scratch operand']
  #allocation3 [shape = 'bf16[144,256]{1,0:T(8,128)(2,1)}', space=vmem, size = 0x12000, scoped, tag = 'scratch operand']
  #allocation4 [shape = 'f32[32,256]{1,0:T(8,128)}', space=vmem, size = 0x8000, scoped, tag = 'scratch operand']
  %s0 = inlined_call_operand.hbm [shape: f32[2,4,256], index: 0, kind: input, shape index: {}]
  %s1 = inlined_call_operand.hbm [shape: f32[2,8,256], index: 1, kind: input, shape index: {}]
  %s2 = inlined_call_operand.hbm [shape: f32[2,8,256], index: 2, kind: input, shape index: {}]
  %s3 = inlined_call_operand.hbm [shape: bf16[32,144], index: 3, kind: input, shape index: {}]
  %s4 = inlined_call_operand.hbm [shape: f32[2,8,256], index: 4, kind: output, shape index: {0}]
  %s5 = inlined_call_operand.hbm [shape: f32[2,8,256], index: 5, kind: output, shape index: {1}]
  %6 = xla_tuple %s4, %s5
  %s7 = sld [smem:[#allocation0]]
  $region73: #{tpu_custom_call.1} parent=0
    _
  %s9 = ssub.s32 1, %s7
  %s10 = scalar_select 0, %s9, %s7
  $region1: #{tpu_custom_call.1} parent=0
    #allocation5 [shape = 'u8[8192]{0}', space=vmem, size = 0x2000, scoped, tag = 'input window, operand 0']
    #allocation6 [shape = 's32[2]{0}', space=sflag, size = 0x8, scoped, tag = 'scoped memory for tpu_custom_call.1']
    #allocation7 [shape = 's32[2]{0}', space=sflag, size = 0x8, scoped, tag = 'scoped memory for tpu_custom_call.1']
    #allocation8 [shape = 'u8[16384]{0}', space=vmem, size = 0x4000, scoped, tag = 'input window, operand 1']
    #allocation9 [shape = 's32[2]{0}', space=sflag, size = 0x8, scoped, tag = 'scoped memory for tpu_custom_call.1']
    #allocation10 [shape = 'u8[16384]{0}', space=vmem, size = 0x4000, scoped, tag = 'input window, operand 2']
    #allocation11 [shape = 'u8[16384]{0}', space=vmem, size = 0x4000, scoped, tag = 'input window, operand 3, single buffered']
    #allocation12 [shape = 's32[1]{0}', space=sflag, size = 0x4, scoped, tag = 'scoped memory for tpu_custom_call.1']
    #allocation13 [shape = 'u8[16384]{0}', space=vmem, size = 0x4000, scoped, tag = 'output window, operand 0']
    #allocation14 [shape = 'u8[16384]{0}', space=vmem, size = 0x4000, scoped, tag = 'output window, operand 1']
    #allocation15 [shape = 's32[2]{0}', space=sflag, size = 0x8, scoped, tag = 'scoped memory for tpu_custom_call.1']
    %11 = vsyncpa [#allocation6], 0
    %s12 = scalar_lea.sflag [#allocation6], 1
    %13 = vsyncpa %s12, 0
    %14 = vsyncpa [#allocation9], 0
    %s15 = scalar_lea.sflag [#allocation9], 1
    %16 = vsyncpa %s15, 0
    %17 = vsyncpa [#allocation12], 0
    %18 = vsyncpa [#allocation7], 0
    %s19 = scalar_lea.sflag [#allocation7], 1
    %20 = vsyncpa %s19, 0
    %21 = vsyncpa [#allocation15], 0
    %s22 = scalar_lea.sflag [#allocation15], 1
    %23 = vsyncpa %s22, 0
    loop: start=0, step=1, limit=4
    $region2: #{tpu_custom_call.1} parent=1 // loop_pre_header
      _
    $region3: #{tpu_custom_call.1} parent=1 // loop_header
      %s25 = sphi 0, %s29
      %p26 = scmp.ge.s32.totalorder %s25, 4
      %s35 = sphi 0, %s37
      %s38 = sphi 0, %s35
      %s39 = sphi 0, %s38
      %s55 = sphi 0, %s39
      %s61 = sphi 0, %s63
      %s64 = sphi 0, %s61
      %s65 = sphi 0, %s64
      %s81 = sphi 0, %s65
      %s87 = sphi 0, %s89
      %s90 = sphi 0, %s87
      %s91 = sphi 0, %s90
      %s107 = sphi 0, %s91
      %s111 = sphi 0, %s111
      %s113 = sphi 0, %s111
      %s114 = sphi 0, %s113
      %s128 = sphi 0, %s114
      %s134 = sphi 0, %s136
      %s137 = sphi 0, %s134
      %s138 = sphi 0, %s137
      %s154 = sphi 0, %s138
      %s160 = sphi 0, %s162
      %s163 = sphi 0, %s160
      %s164 = sphi 0, %s163
      %s180 = sphi 0, %s164
    $region4: #{tpu_custom_call.1} parent=1 // loop_header_branch
      %28 = sbr.rel (%p26) target = $region8
    $region5: #{tpu_custom_call.1} parent=1 // loop_body
      %s30 = ssub.s32 %s25, 1
      %s31 = ssub.s32 %s25, 2
      %s32 = sadd.s32 %s25, 1
      %s33 = ssub.s32 %s25, %s32
      %p34 = scmp.eq.s32.totalorder %s33, 0
      %s36 = sadd.s32 %s35, 1
      %s37 = scalar_select %p34, %s35, %s36
      %p40 = pneg %p34
      %p41 = scmp.eq.s32.totalorder %s25, 1
      %p42 = por %p40, %p41
      %p43 = scmp.ne.s32.totalorder %s35, %s38
      %p44 = scmp.eq.s32.totalorder %s25, 0
      %p45 = por %p43, %p44
      %p46 = scmp.ne.s32.totalorder %s35, %s38
      %p47 = scmp.eq.s32.totalorder %s30, 1
      %p48 = por %p46, %p47
      %p49 = scmp.ne.s32.totalorder %s38, %s39
      %p50 = scmp.eq.s32.totalorder %s30, 0
      %p51 = por %p49, %p50
      %p52 = scmp.ne.s32.totalorder %s38, %s39
      %p53 = scmp.eq.s32.totalorder %s31, 1
      %p54 = por %p52, %p53
      %p56 = scmp.ne.s32.totalorder %s39, %s55
      %p57 = scmp.eq.s32.totalorder %s31, 0
      %p58 = por %p56, %p57
      %s59 = ssub.s32 %s25, %s32
      %p60 = scmp.eq.s32.totalorder %s59, 0
      %s62 = sadd.s32 %s61, 1
      %s63 = scalar_select %p60, %s61, %s62
      %p66 = pneg %p60
      %p67 = scmp.eq.s32.totalorder %s25, 1
      %p68 = por %p66, %p67
      %p69 = scmp.ne.s32.totalorder %s61, %s64
      %p70 = scmp.eq.s32.totalorder %s25, 0
      %p71 = por %p69, %p70
      %p72 = scmp.ne.s32.totalorder %s61, %s64
      %p73 = scmp.eq.s32.totalorder %s30, 1
      %p74 = por %p72, %p73
      %p75 = scmp.ne.s32.totalorder %s64, %s65
      %p76 = scmp.eq.s32.totalorder %s30, 0
      %p77 = por %p75, %p76
      %p78 = scmp.ne.s32.totalorder %s64, %s65
      %p79 = scmp.eq.s32.totalorder %s31, 1
      %p80 = por %p78, %p79
      %p82 = scmp.ne.s32.totalorder %s65, %s81
      %p83 = scmp.eq.s32.totalorder %s31, 0
      %p84 = por %p82, %p83
      %s85 = ssub.s32 %s25, %s32
      %p86 = scmp.eq.s32.totalorder %s85, 0
      %s88 = sadd.s32 %s87, 1
      %s89 = scalar_select %p86, %s87, %s88
      %p92 = pneg %p86
      %p93 = scmp.eq.s32.totalorder %s25, 1
      %p94 = por %p92, %p93
      %p95 = scmp.ne.s32.totalorder %s87, %s90
      %p96 = scmp.eq.s32.totalorder %s25, 0
      %p97 = por %p95, %p96
      %p98 = scmp.ne.s32.totalorder %s87, %s90
      %p99 = scmp.eq.s32.totalorder %s30, 1
      %p100 = por %p98, %p99
      %p101 = scmp.ne.s32.totalorder %s90, %s91
      %p102 = scmp.eq.s32.totalorder %s30, 0
      %p103 = por %p101, %p102
      %p104 = scmp.ne.s32.totalorder %s90, %s91
      %p105 = scmp.eq.s32.totalorder %s31, 1
      %p106 = por %p104, %p105
      %p108 = scmp.ne.s32.totalorder %s91, %s107
      %p109 = scmp.eq.s32.totalorder %s31, 0
      %p110 = por %p108, %p109
      %s112 = sadd.s32 %s111, 1
      %p115 = scmp.eq.s32.totalorder %s25, 1
      %p116 = scmp.ne.s32.totalorder %s111, %s113
      %p117 = scmp.eq.s32.totalorder %s25, 0
      %p118 = por %p116, %p117
      %p119 = scmp.ne.s32.totalorder %s111, %s113
      %p120 = scmp.eq.s32.totalorder %s30, 1
      %p121 = por %p119, %p120
      %p122 = scmp.ne.s32.totalorder %s113, %s114
      %p123 = scmp.eq.s32.totalorder %s30, 0
      %p124 = por %p122, %p123
      %p125 = scmp.ne.s32.totalorder %s113, %s114
      %p126 = scmp.eq.s32.totalorder %s31, 1
      %p127 = por %p125, %p126
      %p129 = scmp.ne.s32.totalorder %s114, %s128
      %p130 = scmp.eq.s32.totalorder %s31, 0
      %p131 = por %p129, %p130
      %s132 = ssub.s32 %s25, %s32
      %p133 = scmp.eq.s32.totalorder %s132, 0
      %s135 = sadd.s32 %s134, 1
      %s136 = scalar_select %p133, %s134, %s135
      %p139 = pneg %p133
      %p140 = scmp.eq.s32.totalorder %s25, 1
      %p141 = por %p139, %p140
      %p142 = scmp.ne.s32.totalorder %s134, %s137
      %p143 = scmp.eq.s32.totalorder %s25, 0
      %p144 = por %p142, %p143
      %p145 = scmp.ne.s32.totalorder %s134, %s137
      %p146 = scmp.eq.s32.totalorder %s30, 1
      %p147 = por %p145, %p146
      %p148 = scmp.ne.s32.totalorder %s137, %s138
      %p149 = scmp.eq.s32.totalorder %s30, 0
      %p150 = por %p148, %p149
      %p151 = scmp.ne.s32.totalorder %s137, %s138
      %p152 = scmp.eq.s32.totalorder %s31, 1
      %p153 = por %p151, %p152
      %p155 = scmp.ne.s32.totalorder %s138, %s154
      %p156 = scmp.eq.s32.totalorder %s31, 0
      %p157 = por %p155, %p156
      %s158 = ssub.s32 %s25, %s32
      %p159 = scmp.eq.s32.totalorder %s158, 0
      %s161 = sadd.s32 %s160, 1
      %s162 = scalar_select %p159, %s160, %s161
      %p165 = pneg %p159
      %p166 = scmp.eq.s32.totalorder %s25, 1
      %p167 = por %p165, %p166
      %p168 = scmp.ne.s32.totalorder %s160, %s163
      %p169 = scmp.eq.s32.totalorder %s25, 0
      %p170 = por %p168, %p169
      %p171 = scmp.ne.s32.totalorder %s160, %s163
      %p172 = scmp.eq.s32.totalorder %s30, 1
      %p173 = por %p171, %p172
      %p174 = scmp.ne.s32.totalorder %s163, %s164
      %p175 = scmp.eq.s32.totalorder %s30, 0
      %p176 = por %p174, %p175
      %p177 = scmp.ne.s32.totalorder %s163, %s164
      %p178 = scmp.eq.s32.totalorder %s31, 1
      %p179 = por %p177, %p178
      %p181 = scmp.ne.s32.totalorder %s164, %s180
      %p182 = scmp.eq.s32.totalorder %s31, 0
      %p183 = por %p181, %p182
      %p184 = scmp.le.s32.totalorder 1, %s25
      %p185 = scmp.lt.s32.totalorder %s25, 3
      %p186 = pnand %p184, %p185
      %p187 = pneg %p186
      // Predicated region
      $region9: #{tpu_custom_call.1} parent=5 // pred_check
        _
      $region10: #{tpu_custom_call.1} parent=5 // pred_check_branch
        %189 = sbr.rel (%p186) target = $region12
      $region11: #{tpu_custom_call.1} parent=5 // pred_region
        %s190 = ssub.s32 %s25, 1
        // Predicated region
        $region13: #{tpu_custom_call.1} parent=11 // pred_check
          %p191 = pneg %p124
        $region14: #{tpu_custom_call.1} parent=11 // pred_check_branch
          %193 = sbr.rel (%p191) target = $region16
        $region15: #{tpu_custom_call.1} parent=11 // pred_region
          %195 = vsyncadd [#allocation12], 0
          %s196 = sshll.u32 %s3, 4
          %s197 = int_to_ptr.hbm [resolvable:$true] %s196
          %s198 = sshll.u32 [#allocation11], 4
          %s199 = int_to_ptr.vmem [resolvable:$true] %s198
          %204 = dma.hbm_to_vmem [thread:$0]  %s197, 512, %s199, [#allocation12], 128, 128, 8
        $region16: #{tpu_custom_call.1} parent=11 // pred_fallthru
          _
      $region12: #{tpu_custom_call.1} parent=5 // pred_fallthru
        _
      %p205 = scmp.lt.s32.totalorder %s25, 2
      // Predicated region
      $region17: #{tpu_custom_call.1} parent=5 // pred_check
        %p206 = pneg %p205
      $region18: #{tpu_custom_call.1} parent=5 // pred_check_branch
        %208 = sbr.rel (%p206) target = $region20
      $region19: #{tpu_custom_call.1} parent=5 // pred_region
        // Predicated region
        $region21: #{tpu_custom_call.1} parent=19 // pred_check
          %p209 = pneg %p45
        $region22: #{tpu_custom_call.1} parent=19 // pred_check_branch
          %211 = sbr.rel (%p209) target = $region24
        $region23: #{tpu_custom_call.1} parent=19 // pred_region
          %s212 = sand.u32 %s35, 1
          %s213 = scalar_lea.sflag [#allocation6], %s212
          %s214 = sand.u32 %s35, 1
          %s215 = smul.addr %s214, 8
          %s216 = scalar_lea.vmem [#allocation5], %s215
          %218 = vsyncadd %s213, 0
          %s219 = smul.addr %s25, 2
          %s220 = smul.addr %s219, 4
          %s221 = scalar_lea.hbm %s0, %s220
          %s223 = sshll.u32 %s221, 4
          %s224 = int_to_ptr.hbm [resolvable:$true] %s223
          %s225 = sshll.u32 %s216, 4
          %s226 = int_to_ptr.vmem [resolvable:$true] %s225
          %228 = dma.hbm_to_vmem [thread:$0]  %s224, 128, %s226, %s213
        $region24: #{tpu_custom_call.1} parent=19 // pred_fallthru
          _
        // Predicated region
        $region25: #{tpu_custom_call.1} parent=19 // pred_check
          %p229 = pneg %p71
        $region26: #{tpu_custom_call.1} parent=19 // pred_check_branch
          %231 = sbr.rel (%p229) target = $region28
        $region27: #{tpu_custom_call.1} parent=19 // pred_region
          %s232 = sand.u32 %s25, 1
          %s233 = scalar_lea.sflag [#allocation9], %s232
          %s234 = sand.u32 %s61, 1
          %s235 = smul.addr %s234, 16
          %s236 = scalar_lea.vmem [#allocation8], %s235
          %238 = vsyncadd %s233, 0
          %s239 = smul.addr %s25, 2
          %s240 = smul.addr %s239, 8
          %s241 = scalar_lea.hbm %s1, %s240
          %s243 = sshll.u32 %s241, 4
          %s244 = int_to_ptr.hbm [resolvable:$true] %s243
          %s245 = sshll.u32 %s236, 4
          %s246 = int_to_ptr.vmem [resolvable:$true] %s245
          %248 = dma.hbm_to_vmem [thread:$0]  %s244, 256, %s246, %s233
        $region28: #{tpu_custom_call.1} parent=19 // pred_fallthru
          _
        // Predicated region
        $region29: #{tpu_custom_call.1} parent=19 // pred_check
          %p249 = pneg %p97
        $region30: #{tpu_custom_call.1} parent=19 // pred_check_branch
          %251 = sbr.rel (%p249) target = $region32
        $region31: #{tpu_custom_call.1} parent=19 // pred_region
          %s252 = sand.u32 %s25, 1
          %s253 = scalar_lea.sflag [#allocation9], %s252
          %s254 = sand.u32 %s87, 1
          %s255 = smul.addr %s254, 16
          %s256 = scalar_lea.vmem [#allocation10], %s255
          %258 = vsyncadd %s253, 0
          %s259 = smul.addr %s25, 2
          %s260 = smul.addr %s259, 8
          %s261 = scalar_lea.hbm %s2, %s260
          %s263 = sshll.u32 %s261, 4
          %s264 = int_to_ptr.hbm [resolvable:$true] %s263
          %s265 = sshll.u32 %s256, 4
          %s266 = int_to_ptr.vmem [resolvable:$true] %s265
          %268 = dma.hbm_to_vmem [thread:$0]  %s264, 256, %s266, %s253
        $region32: #{tpu_custom_call.1} parent=19 // pred_fallthru
          _
      $region20: #{tpu_custom_call.1} parent=5 // pred_fallthru
        _
      %p269 = scmp.le.s32.totalorder 1, %s25
      %p270 = scmp.lt.s32.totalorder %s25, 3
      %p271 = pnand %p269, %p270
      %p272 = pneg %p271
      // Predicated region
      $region33: #{tpu_custom_call.1} parent=5 // pred_check
        _
      $region34: #{tpu_custom_call.1} parent=5 // pred_check_branch
        %274 = sbr.rel (%p271) target = $region36
      $region35: #{tpu_custom_call.1} parent=5 // pred_region
        %s275 = ssub.s32 %s25, 1
        %s276 = sand.u32 %s38, 1
        %s277 = scalar_lea.sflag [#allocation6], %s276
        %s278 = sand.u32 %s38, 1
        %s279 = smul.addr %s278, 8
        %s280 = scalar_lea.vmem [#allocation5], %s279
        // Predicated region
        $region37: #{tpu_custom_call.1} parent=35 // pred_check
          %p281 = pneg %p51
        $region38: #{tpu_custom_call.1} parent=35 // pred_check_branch
          %283 = sbr.rel (%p281) target = $region40
        $region39: #{tpu_custom_call.1} parent=35 // pred_region
          %285 = dma.done %s277, 128
        $region40: #{tpu_custom_call.1} parent=35 // pred_fallthru
          _
        %s286 = sand.u32 %s30, 1
        %s287 = scalar_lea.sflag [#allocation9], %s286
        %s288 = sand.u32 %s64, 1
        %s289 = smul.addr %s288, 16
        %s290 = scalar_lea.vmem [#allocation8], %s289
        // Predicated region
        $region41: #{tpu_custom_call.1} parent=35 // pred_check
          %p291 = pneg %p77
        $region42: #{tpu_custom_call.1} parent=35 // pred_check_branch
          %293 = sbr.rel (%p291) target = $region44
        $region43: #{tpu_custom_call.1} parent=35 // pred_region
          %295 = dma.done %s287, 256
        $region44: #{tpu_custom_call.1} parent=35 // pred_fallthru
          _
        %s296 = sand.u32 %s30, 1
        %s297 = scalar_lea.sflag [#allocation9], %s296
        %s298 = sand.u32 %s90, 1
        %s299 = smul.addr %s298, 16
        %s300 = scalar_lea.vmem [#allocation10], %s299
        // Predicated region
        $region45: #{tpu_custom_call.1} parent=35 // pred_check
          %p301 = pneg %p103
        $region46: #{tpu_custom_call.1} parent=35 // pred_check_branch
          %303 = sbr.rel (%p301) target = $region48
        $region47: #{tpu_custom_call.1} parent=35 // pred_region
          %305 = dma.done %s297, 256
        $region48: #{tpu_custom_call.1} parent=35 // pred_fallthru
          _
        // Predicated region
        $region49: #{tpu_custom_call.1} parent=35 // pred_check
          %p306 = pneg %p124
        $region50: #{tpu_custom_call.1} parent=35 // pred_check_branch
          %308 = sbr.rel (%p306) target = $region52
        $region51: #{tpu_custom_call.1} parent=35 // pred_region
          %310 = dma.done [#allocation12], 512
        $region52: #{tpu_custom_call.1} parent=35 // pred_fallthru
          _
        %s311 = sand.u32 %s38, 1
        %s312 = scalar_lea.sflag [#allocation6], %s311
        %s313 = sand.u32 %s38, 1
        %s314 = smul.addr %s313, 8
        %s315 = scalar_lea.vmem [#allocation5], %s314
        %p316 = pneg %p51
        %p317 = pneg %p48
        %s318 = sand.u32 %s30, 1
        %s319 = scalar_lea.sflag [#allocation9], %s318
        %s320 = sand.u32 %s64, 1
        %s321 = smul.addr %s320, 16
        %s322 = scalar_lea.vmem [#allocation8], %s321
        %p323 = pneg %p77
        %p324 = pneg %p74
        %s325 = sand.u32 %s30, 1
        %s326 = scalar_lea.sflag [#allocation9], %s325
        %s327 = sand.u32 %s90, 1
        %s328 = smul.addr %s327, 16
        %s329 = scalar_lea.vmem [#allocation10], %s328
        %p330 = pneg %p103
        %p331 = pneg %p100
        %p332 = pneg %p124
        %p333 = pneg %p121
        %p334 = pneg %p150
        %p335 = pneg %p147
        %s336 = sand.u32 %s137, 1
        %s337 = scalar_lea.sflag [#allocation7], %s336
        %s338 = sand.u32 %s137, 1
        %s339 = smul.addr %s338, 16
        %s340 = scalar_lea.vmem [#allocation13], %s339
        %p341 = pneg %p176
        %p342 = pneg %p173
        %s343 = sand.u32 %s163, 1
        %s344 = scalar_lea.sflag [#allocation15], %s343
        %s345 = sand.u32 %s163, 1
        %s346 = smul.addr %s345, 16
        %s347 = scalar_lea.vmem [#allocation14], %s346
        %349 = vst [vmem:[#allocation2] sm:$0xff] 0.0
        %350 = vst [vmem:[#allocation2 + $0x8] sm:$0xff] 0.0
        %vm351 = vcmask 277504
        %352 = vst.msk [vmem:[#allocation2 + $0x10] sm:$0xff] %vm351, 0.0
        %353 = vst [vmem:[#allocation2 + $0x18] sm:$0xff] 0.0
        %354 = vst [vmem:[#allocation2 + $0x20] sm:$0xff] 0.0
        %355 = vst.msk [vmem:[#allocation2 + $0x28] sm:$0xff] %vm351, 0.0
        %v356 = vlaneseq
        %vm357 = vcmp.ge.s32.totalorder %v356, 17
        %vm358 = vcmp.lt.s32.totalorder %v356, 273
        %vm359 = vmand %vm357, %vm358
        %s360 = scalar_lea.vmem [#allocation2], 28
        %361 = vst.msk [vmem:[%s360] ss:$8 sm:$0x7] %vm359, 1.0
        %362 = vst.msk [vmem:[%s360] ss:$8 sm:$0x0] %vm359, 1.0
        %v363 = vlaneseq
        %v364 = vand.u32 %v363, 127
        %v365 = vadd.s32 %v364, 128
        %vm366 = vcmp.lt.s32.totalorder %v364, 0
        %v367 = vsub.s32 0, %v364
        %v368 = vsel %vm366, %v367, %v364
        %v369 = vshrl.u32 %v368, 4
        %v370 = vand.u32 %v368, 15
        %v371 = vsub.s32 0, %v370
        %v372 = vsel %vm366, %v371, %v370
        %vm373 = vcmp.lt.s32.totalorder %v365, 0
        %v374 = vsub.s32 0, %v365
        %v375 = vsel %vm373, %v374, %v365
        %v376 = vshrl.u32 %v375, 4
        %v377 = vand.u32 %v375, 15
        %v378 = vsub.s32 0, %v377
        %v379 = vsel %vm373, %v378, %v377
        %vm380 = vcmp.ne.s32.totalorder %v372, 0
        %vm381 = vcmp.ne.s32.totalorder %v379, 0
        %vm382 = vcmp.lt.s32.totalorder %v372, 0
        %vm383 = vcmp.lt.s32.totalorder %v379, 0
        %vm384 = vmand %vm382, %vm380
        %vm385 = vmand %vm383, %vm381
        %v386 = vadd.s32 %v372, 16
        %v387 = vadd.s32 %v379, 16
        %v388 = vsel %vm384, %v386, %v372
        %v389 = vsel %vm385, %v387, %v379
        %vm390 = vcmp.ge.s32.totalorder %v388, 1
        %vm391 = vcmp.ge.s32.totalorder %v389, 1
        %vm392 = vcmp.lt.s32.totalorder %v388, 15
        %vm393 = vcmp.lt.s32.totalorder %v389, 15
        %v394 = vld [vmem:[%s280] sm:$0xff]
        %396 = vst [vmem:[#allocation1] ss:$2 sm:$0xff] %v394
        %v397 = vld.sshfl [vmem:[#allocation1] sm:$0xff pattern:$0x75316420]
        %v398 = vld.sshfl [vmem:[#allocation1 + $0x8] sm:$0xff pattern:$0x75316420]
        %399 = vrot.lane.b32.xlu0 %v397, 17
        %v400 = vpop.permute.xlu0 %399
        %401 = vrot.lane.b32.xlu0 %v398, 17
        %v402 = vpop.permute.xlu0 %401
        %vm403 = vcmask 138240
        %v404 = vsel %vm403, %v400, %v402
        %vm408 = vcmask 1043592
        %409 = vst.msk [vmem:[#allocation2] sm:$0xf] %vm408, %v400
        %410 = vst [vmem:[#allocation2 + $0x8] sm:$0xf] %v404
        %vm411 = vcmask 134144
        %412 = vst.msk [vmem:[#allocation2 + $0x10] sm:$0xf] %vm411, %v402
        %v413 = vld [vmem:[%s290] sm:$0xff]
        %v414 = vld [vmem:[%s290 + $0x8] sm:$0xff]
        %v417 = vrot.slane %v413, 4
        %v418 = vrot.slane %v414, 4
        %419 = vrot.lane.b32.xlu0 %v417, 17
        %v420 = vpop.permute.xlu0 %419
        %421 = vrot.lane.b32.xlu0 %v418, 17
        %v422 = vpop.permute.xlu0 %421
        %v423 = vsel %vm403, %v420, %v422
        %vm427 = vcmask 1047692
        %428 = vst.msk [vmem:[#allocation2] sm:$0xf0] %vm427, %v420
        %429 = vst [vmem:[#allocation2 + $0x8] sm:$0xf0] %v423
        %vm430 = vcmask 138244
        %431 = vst.msk [vmem:[#allocation2 + $0x10] sm:$0xf0] %vm430, %v422
        %432 = vst.msk [vmem:[#allocation2 + $0x18] sm:$0xf] %vm408, %v420
        %433 = vst [vmem:[#allocation2 + $0x20] sm:$0xf] %v423
        %434 = vst.msk [vmem:[#allocation2 + $0x28] sm:$0xf] %vm411, %v422
        %v435 = vld [vmem:[#allocation2] sm:$0xff]
        %v436 = vld [vmem:[#allocation2 + $0x8] sm:$0xff]
        %v437 = vld [vmem:[#allocation2 + $0x18] sm:$0xff]
        %v438 = vld [vmem:[#allocation2 + $0x20] sm:$0xff]
        %v439 = vsel %vm390, %v435, 0.0
        %v440 = vsel %vm391, %v436, 0.0
        %v441 = vsel %vm390, %v437, 0.0
        %v442 = vsel %vm391, %v438, 0.0
        %v443 = vpack.c.bf16 %v440, %v439
        %v444 = vpack.c.bf16 %v442, %v441
        %445 = vst [vmem:[#allocation3] sm:$0xff] %v443
        %446 = vst [vmem:[#allocation3 + $0x8] sm:$0xff] %v444
        %v447 = vld [vmem:[#allocation2] sm:$0xff]
        %v448 = vld [vmem:[#allocation2 + $0x8] sm:$0xff]
        %v449 = vld [vmem:[#allocation2 + $0x10] sm:$0xff]
        %v450 = vld [vmem:[#allocation2 + $0x18] sm:$0xff]
        %v451 = vld [vmem:[#allocation2 + $0x20] sm:$0xff]
        %v452 = vld [vmem:[#allocation2 + $0x28] sm:$0xff]
        %v453 = vpack.c.bf16 %v448, %v447
        %v454 = vpack.c.bf16 %v449, %v449
        %v455 = vpack.c.bf16 %v451, %v450
        %v456 = vpack.c.bf16 %v452, %v452
        %461 = vrot.lane.b32.xlu0 %v453, 127
        %v462 = vpop.permute.xlu0 %461
        %463 = vrot.lane.b32.xlu0 %v454, 127
        %v464 = vpop.permute.xlu0 %463
        %465 = vrot.lane.b32.xlu0 %v455, 127
        %v466 = vpop.permute.xlu0 %465
        %467 = vrot.lane.b32.xlu0 %v456, 127
        %v468 = vpop.permute.xlu0 %467
        %v469 = vrot.slane %v462, 4
        %v470 = vrot.slane %v464, 4
        %v471 = vrot.slane %v466, 4
        %v472 = vrot.slane %v468, 4
        %vm473 = vcmask 1043456
        %v474 = vsel %vm473, %v469, %v470
        %vm475 = vcmask 1039360
        %v476 = vsel %vm475, %v462, %v474
        %v477 = vsel %vm473, %v471, %v472
        %v478 = vsel %vm475, %v466, %v477
        %481 = vst [vmem:[#allocation3 + $0x10] sm:$0xff] %v476
        %482 = vst [vmem:[#allocation3 + $0x18] sm:$0xff] %v478
        %v483 = vld [vmem:[#allocation2] sm:$0xff]
        %v484 = vld [vmem:[#allocation2 + $0x8] sm:$0xff]
        %v485 = vld [vmem:[#allocation2 + $0x10] sm:$0xff]
        %v486 = vld [vmem:[#allocation2 + $0x18] sm:$0xff]
        %v487 = vld [vmem:[#allocation2 + $0x20] sm:$0xff]
        %v488 = vld [vmem:[#allocation2 + $0x28] sm:$0xff]
        %495 = vrot.lane.b32.xlu0 %v483, 126
        %v496 = vpop.permute.xlu0 %495
        %497 = vrot.lane.b32.xlu0 %v484, 126
        %v498 = vpop.permute.xlu0 %497
        %499 = vrot.lane.b32.xlu0 %v485, 126
        %v500 = vpop.permute.xlu0 %499
        %501 = vrot.lane.b32.xlu0 %v486, 126
        %v502 = vpop.permute.xlu0 %501
        %503 = vrot.lane.b32.xlu0 %v487, 126
        %v504 = vpop.permute.xlu0 %503
        %505 = vrot.lane.b32.xlu0 %v488, 126
        %v506 = vpop.permute.xlu0 %505
        %vm507 = vcmask 1031168
        %v508 = vsel %vm507, %v496, %v498
        %v509 = vsel %vm507, %v498, %v500
        %v510 = vsel %vm507, %v502, %v504
        %v511 = vsel %vm507, %v504, %v506
        %v516 = vsel %vm392, %v508, 0.0
        %v517 = vsel %vm393, %v509, 0.0
        %v518 = vsel %vm392, %v510, 0.0
        %v519 = vsel %vm393, %v511, 0.0
        %v520 = vpack.c.bf16 %v517, %v516
        %v521 = vpack.c.bf16 %v519, %v518
        %522 = vst [vmem:[#allocation3 + $0x20] sm:$0xff] %v520
        %523 = vst [vmem:[#allocation3 + $0x28] sm:$0xff] %v521
        %v524 = vld [vmem:[#allocation2] sm:$0xff]
        %v525 = vld [vmem:[#allocation2 + $0x8] sm:$0xff]
        %v526 = vld [vmem:[#allocation2 + $0x10] sm:$0xff]
        %v527 = vld [vmem:[#allocation2 + $0x18] sm:$0xff]
        %v528 = vld [vmem:[#allocation2 + $0x20] sm:$0xff]
        %v529 = vld [vmem:[#allocation2 + $0x28] sm:$0xff]
        %536 = vrot.lane.b32.xlu0 %v524, 112
        %v537 = vpop.permute.xlu0 %536
        %538 = vrot.lane.b32.xlu0 %v525, 112
        %v539 = vpop.permute.xlu0 %538
        %540 = vrot.lane.b32.xlu0 %v526, 112
        %v541 = vpop.permute.xlu0 %540
        %542 = vrot.lane.b32.xlu0 %v527, 112
        %v543 = vpop.permute.xlu0 %542
        %544 = vrot.lane.b32.xlu0 %v528, 112
        %v545 = vpop.permute.xlu0 %544
        %546 = vrot.lane.b32.xlu0 %v529, 112
        %v547 = vpop.permute.xlu0 %546
        %vm548 = vcmask 916480
        %v549 = vsel %vm548, %v537, %v539
        %v550 = vsel %vm548, %v539, %v541
        %v551 = vsel %vm548, %v543, %v545
        %v552 = vsel %vm548, %v545, %v547
        %v557 = vsel %vm390, %v549, 0.0
        %v558 = vsel %vm391, %v550, 0.0
        %v559 = vsel %vm390, %v551, 0.0
        %v560 = vsel %vm391, %v552, 0.0
        %v561 = vpack.c.bf16 %v558, %v557
        %v562 = vpack.c.bf16 %v560, %v559
        %563 = vst [vmem:[#allocation3 + $0x30] sm:$0xff] %v561
        %564 = vst [vmem:[#allocation3 + $0x38] sm:$0xff] %v562
        %v565 = vld [vmem:[#allocation2] sm:$0xff]
        %v566 = vld [vmem:[#allocation2 + $0x8] sm:$0xff]
        %v567 = vld [vmem:[#allocation2 + $0x10] sm:$0xff]
        %v568 = vld [vmem:[#allocation2 + $0x18] sm:$0xff]
        %v569 = vld [vmem:[#allocation2 + $0x20] sm:$0xff]
        %v570 = vld [vmem:[#allocation2 + $0x28] sm:$0xff]
        %v571 = vpack.c.bf16 %v566, %v565
        %v572 = vpack.c.bf16 %v567, %v567
        %v573 = vpack.c.bf16 %v569, %v568
        %v574 = vpack.c.bf16 %v570, %v570
        %579 = vrot.lane.b32.xlu0 %v571, 111
        %v580 = vpop.permute.xlu0 %579
        %581 = vrot.lane.b32.xlu0 %v572, 111
        %v582 = vpop.permute.xlu0 %581
        %583 = vrot.lane.b32.xlu0 %v573, 111
        %v584 = vpop.permute.xlu0 %583
        %585 = vrot.lane.b32.xlu0 %v574, 111
        %v586 = vpop.permute.xlu0 %585
        %v587 = vrot.slane %v580, 4
        %v588 = vrot.slane %v582, 4
        %v589 = vrot.slane %v584, 4
        %v590 = vrot.slane %v586, 4
        %v591 = vsel %vm473, %v587, %v588
        %vm592 = vcmask 908288
        %v593 = vsel %vm592, %v580, %v591
        %v594 = vsel %vm473, %v589, %v590
        %v595 = vsel %vm592, %v584, %v594
        %598 = vst [vmem:[#allocation3 + $0x40] sm:$0xff] %v593
        %599 = vst [vmem:[#allocation3 + $0x48] sm:$0xff] %v595
        %v600 = vld [vmem:[#allocation2] sm:$0xff]
        %v601 = vld [vmem:[#allocation2 + $0x8] sm:$0xff]
        %v602 = vld [vmem:[#allocation2 + $0x10] sm:$0xff]
        %v603 = vld [vmem:[#allocation2 + $0x18] sm:$0xff]
        %v604 = vld [vmem:[#allocation2 + $0x20] sm:$0xff]
        %v605 = vld [vmem:[#allocation2 + $0x28] sm:$0xff]
        %612 = vrot.lane.b32.xlu0 %v600, 110
        %v613 = vpop.permute.xlu0 %612
        %614 = vrot.lane.b32.xlu0 %v601, 110
        %v615 = vpop.permute.xlu0 %614
        %616 = vrot.lane.b32.xlu0 %v602, 110
        %v617 = vpop.permute.xlu0 %616
        %618 = vrot.lane.b32.xlu0 %v603, 110
        %v619 = vpop.permute.xlu0 %618
        %620 = vrot.lane.b32.xlu0 %v604, 110
        %v621 = vpop.permute.xlu0 %620
        %622 = vrot.lane.b32.xlu0 %v605, 110
        %v623 = vpop.permute.xlu0 %622
        %vm624 = vcmask 900096
        %v625 = vsel %vm624, %v613, %v615
        %v626 = vsel %vm624, %v615, %v617
        %v627 = vsel %vm624, %v619, %v621
        %v628 = vsel %vm624, %v621, %v623
        %v633 = vsel %vm392, %v625, 0.0
        %v634 = vsel %vm393, %v626, 0.0
        %v635 = vsel %vm392, %v627, 0.0
        %v636 = vsel %vm393, %v628, 0.0
        %v637 = vpack.c.bf16 %v634, %v633
        %v638 = vpack.c.bf16 %v636, %v635
        %639 = vst [vmem:[#allocation3 + $0x50] sm:$0xff] %v637
        %640 = vst [vmem:[#allocation3 + $0x58] sm:$0xff] %v638
        %v641 = vld [vmem:[#allocation2] sm:$0xff]
        %v642 = vld [vmem:[#allocation2 + $0x8] sm:$0xff]
        %v643 = vld [vmem:[#allocation2 + $0x10] sm:$0xff]
        %v644 = vld [vmem:[#allocation2 + $0x18] sm:$0xff]
        %v645 = vld [vmem:[#allocation2 + $0x20] sm:$0xff]
        %v646 = vld [vmem:[#allocation2 + $0x28] sm:$0xff]
        %653 = vrot.lane.b32.xlu0 %v641, 96
        %v654 = vpop.permute.xlu0 %653
        %655 = vrot.lane.b32.xlu0 %v642, 96
        %v656 = vpop.permute.xlu0 %655
        %657 = vrot.lane.b32.xlu0 %v643, 96
        %v658 = vpop.permute.xlu0 %657
        %659 = vrot.lane.b32.xlu0 %v644, 96
        %v660 = vpop.permute.xlu0 %659
        %661 = vrot.lane.b32.xlu0 %v645, 96
        %v662 = vpop.permute.xlu0 %661
        %663 = vrot.lane.b32.xlu0 %v646, 96
        %v664 = vpop.permute.xlu0 %663
        %vm665 = vcmask 785408
        %v666 = vsel %vm665, %v654, %v656
        %v667 = vsel %vm665, %v656, %v658
        %v668 = vsel %vm665, %v660, %v662
        %v669 = vsel %vm665, %v662, %v664
        %v674 = vsel %vm390, %v666, 0.0
        %v675 = vsel %vm391, %v667, 0.0
        %v676 = vsel %vm390, %v668, 0.0
        %v677 = vsel %vm391, %v669, 0.0
        %v678 = vpack.c.bf16 %v675, %v674
        %v679 = vpack.c.bf16 %v677, %v676
        %680 = vst [vmem:[#allocation3 + $0x60] sm:$0xff] %v678
        %681 = vst [vmem:[#allocation3 + $0x68] sm:$0xff] %v679
        %v682 = vld [vmem:[#allocation2] sm:$0xff]
        %v683 = vld [vmem:[#allocation2 + $0x8] sm:$0xff]
        %v684 = vld [vmem:[#allocation2 + $0x10] sm:$0xff]
        %v685 = vld [vmem:[#allocation2 + $0x18] sm:$0xff]
        %v686 = vld [vmem:[#allocation2 + $0x20] sm:$0xff]
        %v687 = vld [vmem:[#allocation2 + $0x28] sm:$0xff]
        %v688 = vpack.c.bf16 %v683, %v682
        %v689 = vpack.c.bf16 %v684, %v684
        %v690 = vpack.c.bf16 %v686, %v685
        %v691 = vpack.c.bf16 %v687, %v687
        %696 = vrot.lane.b32.xlu0 %v688, 95
        %v697 = vpop.permute.xlu0 %696
        %698 = vrot.lane.b32.xlu0 %v689, 95
        %v699 = vpop.permute.xlu0 %698
        %700 = vrot.lane.b32.xlu0 %v690, 95
        %v701 = vpop.permute.xlu0 %700
        %702 = vrot.lane.b32.xlu0 %v691, 95
        %v703 = vpop.permute.xlu0 %702
        %v704 = vrot.slane %v697, 4
        %v705 = vrot.slane %v699, 4
        %v706 = vrot.slane %v701, 4
        %v707 = vrot.slane %v703, 4
        %v708 = vsel %vm473, %v704, %v705
        %vm709 = vcmask 777216
        %v710 = vsel %vm709, %v697, %v708
        %v711 = vsel %vm473, %v706, %v707
        %v712 = vsel %vm709, %v701, %v711
        %715 = vst [vmem:[#allocation3 + $0x70] sm:$0xff] %v710
        %716 = vst [vmem:[#allocation3 + $0x78] sm:$0xff] %v712
        %v717 = vld [vmem:[#allocation2] sm:$0xff]
        %v718 = vld [vmem:[#allocation2 + $0x8] sm:$0xff]
        %v719 = vld [vmem:[#allocation2 + $0x10] sm:$0xff]
        %v720 = vld [vmem:[#allocation2 + $0x18] sm:$0xff]
        %v721 = vld [vmem:[#allocation2 + $0x20] sm:$0xff]
        %v722 = vld [vmem:[#allocation2 + $0x28] sm:$0xff]
        %729 = vrot.lane.b32.xlu0 %v717, 94
        %v730 = vpop.permute.xlu0 %729
        %731 = vrot.lane.b32.xlu0 %v718, 94
        %v732 = vpop.permute.xlu0 %731
        %733 = vrot.lane.b32.xlu0 %v719, 94
        %v734 = vpop.permute.xlu0 %733
        %735 = vrot.lane.b32.xlu0 %v720, 94
        %v736 = vpop.permute.xlu0 %735
        %737 = vrot.lane.b32.xlu0 %v721, 94
        %v738 = vpop.permute.xlu0 %737
        %739 = vrot.lane.b32.xlu0 %v722, 94
        %v740 = vpop.permute.xlu0 %739
        %vm741 = vcmask 769024
        %v742 = vsel %vm741, %v730, %v732
        %v743 = vsel %vm741, %v732, %v734
        %v744 = vsel %vm741, %v736, %v738
        %v745 = vsel %vm741, %v738, %v740
        %v750 = vsel %vm392, %v742, 0.0
        %v751 = vsel %vm393, %v743, 0.0
        %v752 = vsel %vm392, %v744, 0.0
        %v753 = vsel %vm393, %v745, 0.0
        %v754 = vpack.c.bf16 %v751, %v750
        %v755 = vpack.c.bf16 %v753, %v752
        %756 = vst [vmem:[#allocation3 + $0x80] sm:$0xff] %v754
        %757 = vst [vmem:[#allocation3 + $0x88] sm:$0xff] %v755
        %v758 = vld [vmem:[#allocation11] sm:$0xff]
        %v759 = vld [vmem:[#allocation11 + $0x8] sm:$0xff]
        %v760 = vld [vmem:[#allocation11 + $0x10] sm:$0xff]
        %v761 = vld [vmem:[#allocation11 + $0x18] sm:$0xff]
        %v762 = vld [vmem:[#allocation3] sm:$0xff]
        %v763 = vld [vmem:[#allocation3 + $0x8] sm:$0xff]
        %v764 = vld [vmem:[#allocation3 + $0x10] sm:$0xff]
        %v765 = vld [vmem:[#allocation3 + $0x18] sm:$0xff]
        %v766 = vld [vmem:[#allocation3 + $0x20] sm:$0xff]
        %v767 = vld [vmem:[#allocation3 + $0x28] sm:$0xff]
        %v768 = vld [vmem:[#allocation3 + $0x30] sm:$0xff]
        %v769 = vld [vmem:[#allocation3 + $0x38] sm:$0xff]
        %v770 = vld [vmem:[#allocation3 + $0x40] sm:$0xff]
        %v771 = vld [vmem:[#allocation3 + $0x48] sm:$0xff]
        %v772 = vld [vmem:[#allocation3 + $0x50] sm:$0xff]
        %v773 = vld [vmem:[#allocation3 + $0x58] sm:$0xff]
        %v774 = vld [vmem:[#allocation3 + $0x60] sm:$0xff]
        %v775 = vld [vmem:[#allocation3 + $0x68] sm:$0xff]
        %v776 = vld [vmem:[#allocation3 + $0x70] sm:$0xff]
        %v777 = vld [vmem:[#allocation3 + $0x78] sm:$0xff]
        %v778 = vld [vmem:[#allocation3 + $0x80] sm:$0xff]
        %v779 = vld [vmem:[#allocation3 + $0x88] sm:$0xff]
        %v784 = vunpack.c.l.b16 %v758
        %v785 = vunpack.c.h.b16 %v758
        %v786 = vunpack.c.l.b16 %v759
        %v787 = vunpack.c.h.b16 %v759
        %v788 = vunpack.c.l.b16 %v760
        %v789 = vunpack.c.h.b16 %v760
        %v790 = vunpack.c.l.b16 %v761
        %v791 = vunpack.c.h.b16 %v761
        %v792 = vpack.c.b16 %v786, %v784
        %v793 = vpack.c.b16 %v787, %v785
        %v794 = vpack.c.b16 %v790, %v788
        %v795 = vpack.c.b16 %v791, %v789
        %v816 = vunpack.c.l.b16 %v762
        %v817 = vunpack.c.h.b16 %v762
        %v818 = vunpack.c.l.b16 %v763
        %v819 = vunpack.c.h.b16 %v763
        %v820 = vunpack.c.l.b16 %v764
        %v821 = vunpack.c.h.b16 %v764
        %v822 = vunpack.c.l.b16 %v765
        %v823 = vunpack.c.h.b16 %v765
        %v824 = vunpack.c.l.b16 %v766
        %v825 = vunpack.c.h.b16 %v766
        %v826 = vunpack.c.l.b16 %v767
        %v827 = vunpack.c.h.b16 %v767
        %v828 = vunpack.c.l.b16 %v768
        %v829 = vunpack.c.h.b16 %v768
        %v830 = vunpack.c.l.b16 %v769
        %v831 = vunpack.c.h.b16 %v769
        %v832 = vunpack.c.l.b16 %v770
        %v833 = vunpack.c.h.b16 %v770
        %v834 = vunpack.c.l.b16 %v771
        %v835 = vunpack.c.h.b16 %v771
        %v836 = vunpack.c.l.b16 %v772
        %v837 = vunpack.c.h.b16 %v772
        %v838 = vunpack.c.l.b16 %v773
        %v839 = vunpack.c.h.b16 %v773
        %v840 = vunpack.c.l.b16 %v774
        %v841 = vunpack.c.h.b16 %v774
        %v842 = vunpack.c.l.b16 %v775
        %v843 = vunpack.c.h.b16 %v775
        %v844 = vunpack.c.l.b16 %v776
        %v845 = vunpack.c.h.b16 %v776
        %v846 = vunpack.c.l.b16 %v777
        %v847 = vunpack.c.h.b16 %v777
        %v848 = vunpack.c.l.b16 %v778
        %v849 = vunpack.c.h.b16 %v778
        %v850 = vunpack.c.l.b16 %v779
        %v851 = vunpack.c.h.b16 %v779
        %v852 = vpack.c.b16 %v818, %v816
        %v853 = vpack.c.b16 %v819, %v817
        %v854 = vpack.c.b16 %v822, %v820
        %v855 = vpack.c.b16 %v823, %v821
        %v856 = vpack.c.b16 %v826, %v824
        %v857 = vpack.c.b16 %v827, %v825
        %v858 = vpack.c.b16 %v830, %v828
        %v859 = vpack.c.b16 %v831, %v829
        %v860 = vpack.c.b16 %v834, %v832
        %v861 = vpack.c.b16 %v835, %v833
        %v862 = vpack.c.b16 %v838, %v836
        %v863 = vpack.c.b16 %v839, %v837
        %v864 = vpack.c.b16 %v842, %v840
        %v865 = vpack.c.b16 %v843, %v841
        %v866 = vpack.c.b16 %v846, %v844
        %v867 = vpack.c.b16 %v847, %v845
        %v868 = vpack.c.b16 %v850, %v848
        %v869 = vpack.c.b16 %v851, %v849
        %vm888 = vcmask 130048
        %v890 = vsel %vm888, %v793, 0
        %v893 = vsel %vm888, %v795, 0
        %895 = vmatpush.bf16.msra.mxu0 %v866
        %896 = vmatpush.bf16.msra.mxu0 %v864
        %897 = vmatpush.bf16.msra.mxu0 %v862
        %898 = vmatpush.bf16.msra.mxu0 %v860
        %899 = vmatpush.bf16.msra.mxu0 %v858
        %900 = vmatpush.bf16.msra.mxu0 %v856
        %901 = vmatpush.bf16.msra.mxu0 %v854
        %902 = vmatpush.bf16.msra.mxu0 %v852
        %903 = vmatmul.bf16.gmra.mxu0 %v792
        %v904 = vpop.f32.mrf.mxu0
        %v905 = vadd.f32 0.0, %v904
        %v906 = vpop.f32.mrf.mxu0
        %v907 = vadd.f32 0.0, %v906
        %908 = vmatmul.bf16.gmra.mxu0 %v794
        %v909 = vpop.f32.mrf.mxu0
        %v910 = vadd.f32 0.0, %v909
        %v911 = vpop.f32.mrf.mxu0
        %v912 = vadd.f32 0.0, %v911
        %913 = vdwg.mxu0
        %914 = vmatpush.bf16.msra.mxu0 0
        %915 = vmatpush.bf16.msra.mxu0 0
        %916 = vmatpush.bf16.msra.mxu0 0
        %917 = vmatpush.bf16.msra.mxu0 0
        %918 = vmatpush.bf16.msra.mxu0 0
        %919 = vmatpush.bf16.msra.mxu0 0
        %920 = vmatpush.bf16.msra.mxu0 0
        %921 = vmatpush.bf16.msra.mxu0 %v868
        %922 = vmatmul.bf16.gmra.mxu0 %v890
        %v923 = vpop.f32.mrf.mxu0
        %v924 = vadd.f32 %v905, %v923
        %v925 = vpop.f32.mrf.mxu0
        %v926 = vadd.f32 %v907, %v925
        %927 = vmatmul.bf16.gmra.mxu0 %v893
        %v928 = vpop.f32.mrf.mxu0
        %v929 = vadd.f32 %v910, %v928
        %v930 = vpop.f32.mrf.mxu0
        %v931 = vadd.f32 %v912, %v930
        %932 = vdwg.mxu0
        %933 = vmatpush.bf16.msra.mxu0 %v867
        %934 = vmatpush.bf16.msra.mxu0 %v865
        %935 = vmatpush.bf16.msra.mxu0 %v863
        %936 = vmatpush.bf16.msra.mxu0 %v861
        %937 = vmatpush.bf16.msra.mxu0 %v859
        %938 = vmatpush.bf16.msra.mxu0 %v857
        %939 = vmatpush.bf16.msra.mxu0 %v855
        %940 = vmatpush.bf16.msra.mxu0 %v853
        %941 = vmatmul.bf16.gmra.mxu0 %v792
        %v942 = vpop.f32.mrf.mxu0
        %v943 = vadd.f32 0.0, %v942
        %v944 = vpop.f32.mrf.mxu0
        %v945 = vadd.f32 0.0, %v944
        %946 = vmatmul.bf16.gmra.mxu0 %v794
        %v947 = vpop.f32.mrf.mxu0
        %v948 = vadd.f32 0.0, %v947
        %v949 = vpop.f32.mrf.mxu0
        %v950 = vadd.f32 0.0, %v949
        %951 = vdwg.mxu0
        %952 = vmatpush.bf16.msra.mxu0 0
        %953 = vmatpush.bf16.msra.mxu0 0
        %954 = vmatpush.bf16.msra.mxu0 0
        %955 = vmatpush.bf16.msra.mxu0 0
        %956 = vmatpush.bf16.msra.mxu0 0
        %957 = vmatpush.bf16.msra.mxu0 0
        %958 = vmatpush.bf16.msra.mxu0 0
        %959 = vmatpush.bf16.msra.mxu0 %v869
        %960 = vmatmul.bf16.gmra.mxu0 %v890
        %v961 = vpop.f32.mrf.mxu0
        %v962 = vadd.f32 %v943, %v961
        %v963 = vpop.f32.mrf.mxu0
        %v964 = vadd.f32 %v945, %v963
        %965 = vmatmul.bf16.gmra.mxu0 %v893
        %v966 = vpop.f32.mrf.mxu0
        %v967 = vadd.f32 %v948, %v966
        %v968 = vpop.f32.mrf.mxu0
        %v969 = vadd.f32 %v950, %v968
        %970 = vdwg.mxu0
        %971 = vst [vmem:[#allocation4] sm:$0xff] %v924
        %972 = vst [vmem:[#allocation4 + $0x8] sm:$0xff] %v962
        %973 = vst [vmem:[#allocation4 + $0x10] sm:$0xff] %v926
        %974 = vst [vmem:[#allocation4 + $0x18] sm:$0xff] %v964
        %975 = vst [vmem:[#allocation4 + $0x20] sm:$0xff] %v929
        %976 = vst [vmem:[#allocation4 + $0x28] sm:$0xff] %v967
        %977 = vst [vmem:[#allocation4 + $0x30] sm:$0xff] %v931
        %978 = vst [vmem:[#allocation4 + $0x38] sm:$0xff] %v969
        %v979 = vld [vmem:[#allocation4] sm:$0xff]
        %v980 = vld [vmem:[#allocation4 + $0x8] sm:$0xff]
        %v981 = vld [vmem:[#allocation4 + $0x10] sm:$0xff]
        %v982 = vld [vmem:[#allocation4 + $0x18] sm:$0xff]
        %v983 = vld [vmem:[#allocation4 + $0x20] sm:$0xff]
        %v984 = vld [vmem:[#allocation4 + $0x28] sm:$0xff]
        %v985 = vld [vmem:[#allocation4 + $0x30] sm:$0xff]
        %v986 = vld [vmem:[#allocation4 + $0x38] sm:$0xff]
        %v987 = vmul.f32 %v979, 0.5
        %v988 = vmul.f32 %v980, 0.5
        %v989 = vtanh.pop %v987
        %v990 = vtanh.pop %v988
        %v991 = vmul.f32 %v989, 0.5
        %v992 = vmul.f32 %v990, 0.5
        %v993 = vadd.f32 %v991, 0.5
        %v994 = vadd.f32 %v992, 0.5
        %v995 = vmul.f32 %v981, 0.5
        %v996 = vmul.f32 %v982, 0.5
        %v997 = vtanh.pop %v995
        %v998 = vtanh.pop %v996
        %v999 = vmul.f32 %v997, 0.5
        %v1000 = vmul.f32 %v998, 0.5
        %v1001 = vadd.f32 %v999, 0.5
        %v1002 = vadd.f32 %v1000, 0.5
        %v1003 = vmul.f32 %v983, 0.5
        %v1004 = vmul.f32 %v984, 0.5
        %v1005 = vtanh.pop %v1003
        %v1006 = vtanh.pop %v1004
        %v1007 = vmul.f32 %v1005, 0.5
        %v1008 = vmul.f32 %v1006, 0.5
        %v1009 = vadd.f32 %v1007, 0.5
        %v1010 = vadd.f32 %v1008, 0.5
        %v1011 = vtanh.pop %v985
        %v1012 = vtanh.pop %v986
        %v1013 = vld [vmem:[%s300] sm:$0xff]
        %v1014 = vld [vmem:[%s300 + $0x8] sm:$0xff]
        %v1015 = vmul.f32 %v1001, %v1013
        %v1016 = vmul.f32 %v1002, %v1014
        %v1017 = vmul.f32 %v993, %v1011
        %v1018 = vmul.f32 %v994, %v1012
        %v1019 = vadd.f32 %v1015, %v1017
        %v1020 = vadd.f32 %v1016, %v1018
        %v1021 = vtanh.pop %v1019
        %v1022 = vtanh.pop %v1020
        %v1023 = vmul.f32 %v1009, %v1021
        %v1024 = vmul.f32 %v1010, %v1022
        %1025 = vst [vmem:[%s347] sm:$0xff] %v1019
        %1026 = vst [vmem:[%s347 + $0x8] sm:$0xff] %v1020
        %1027 = vst [vmem:[%s340] sm:$0xff] %v1023
        %1028 = vst [vmem:[%s340 + $0x8] sm:$0xff] %v1024
        %s1029 = sand.u32 %s137, 1
        %s1030 = scalar_lea.sflag [#allocation7], %s1029
        %s1031 = sand.u32 %s137, 1
        %s1032 = smul.addr %s1031, 16
        %s1033 = scalar_lea.vmem [#allocation13], %s1032
        %s1034 = sand.u32 %s163, 1
        %s1035 = scalar_lea.sflag [#allocation15], %s1034
        %s1036 = sand.u32 %s163, 1
        %s1037 = smul.addr %s1036, 16
        %s1038 = scalar_lea.vmem [#allocation14], %s1037
        // Predicated region
        $region53: #{tpu_custom_call.1} parent=35 // pred_check
          %p1039 = pneg %p147
        $region54: #{tpu_custom_call.1} parent=35 // pred_check_branch
          %1041 = sbr.rel (%p1039) target = $region56
        $region55: #{tpu_custom_call.1} parent=35 // pred_region
          %1043 = vsyncadd %s1030, 0
          %s1044 = smul.addr %s30, 2
          %s1045 = smul.addr %s1044, 8
          %s1046 = scalar_lea.hbm %s4, %s1045
          %s1048 = sshll.u32 %s1033, 4
          %s1049 = int_to_ptr.vmem [resolvable:$true] %s1048
          %s1050 = sshll.u32 %s1046, 4
          %s1051 = int_to_ptr.hbm [resolvable:$true] %s1050
          %1053 = dma.vmem_to_hbm [thread:$0]  %s1049, 256, %s1051, %s1030
        $region56: #{tpu_custom_call.1} parent=35 // pred_fallthru
          _
        // Predicated region
        $region57: #{tpu_custom_call.1} parent=35 // pred_check
          %p1054 = pneg %p173
        $region58: #{tpu_custom_call.1} parent=35 // pred_check_branch
          %1056 = sbr.rel (%p1054) target = $region60
        $region59: #{tpu_custom_call.1} parent=35 // pred_region
          %1058 = vsyncadd %s1035, 0
          %s1059 = smul.addr %s30, 2
          %s1060 = smul.addr %s1059, 8
          %s1061 = scalar_lea.hbm %s5, %s1060
          %s1063 = sshll.u32 %s1038, 4
          %s1064 = int_to_ptr.vmem [resolvable:$true] %s1063
          %s1065 = sshll.u32 %s1061, 4
          %s1066 = int_to_ptr.hbm [resolvable:$true] %s1065
          %1068 = dma.vmem_to_hbm [thread:$0]  %s1064, 256, %s1066, %s1035
        $region60: #{tpu_custom_call.1} parent=35 // pred_fallthru
          _
      $region36: #{tpu_custom_call.1} parent=5 // pred_fallthru
        _
      %p1069 = scmp.le.s32.totalorder 2, %s25
      // Predicated region
      $region61: #{tpu_custom_call.1} parent=5 // pred_check
        %p1070 = pneg %p1069
      $region62: #{tpu_custom_call.1} parent=5 // pred_check_branch
        %1072 = sbr.rel (%p1070) target = $region64
      $region63: #{tpu_custom_call.1} parent=5 // pred_region
        %s1073 = ssub.s32 %s25, 2
        // Predicated region
        $region65: #{tpu_custom_call.1} parent=63 // pred_check
          %p1074 = pneg %p153
        $region66: #{tpu_custom_call.1} parent=63 // pred_check_branch
          %1076 = sbr.rel (%p1074) target = $region68
        $region67: #{tpu_custom_call.1} parent=63 // pred_region
          %s1077 = sand.u32 %s138, 1
          %s1078 = scalar_lea.sflag [#allocation7], %s1077
          %s1079 = sand.u32 %s138, 1
          %s1080 = smul.addr %s1079, 16
          %s1081 = scalar_lea.vmem [#allocation13], %s1080
          %1083 = dma.done %s1078, 256
        $region68: #{tpu_custom_call.1} parent=63 // pred_fallthru
          _
        // Predicated region
        $region69: #{tpu_custom_call.1} parent=63 // pred_check
          %p1084 = pneg %p179
        $region70: #{tpu_custom_call.1} parent=63 // pred_check_branch
          %1086 = sbr.rel (%p1084) target = $region72
        $region71: #{tpu_custom_call.1} parent=63 // pred_region
          %s1087 = sand.u32 %s164, 1
          %s1088 = scalar_lea.sflag [#allocation15], %s1087
          %s1089 = sand.u32 %s164, 1
          %s1090 = smul.addr %s1089, 16
          %s1091 = scalar_lea.vmem [#allocation14], %s1090
          %1093 = dma.done %s1088, 256
        $region72: #{tpu_custom_call.1} parent=63 // pred_fallthru
          _
      $region64: #{tpu_custom_call.1} parent=5 // pred_fallthru
        _
    $region6: #{tpu_custom_call.1} parent=1 // loop_footer
      %s29 = sadd.s32 1, %s25
    $region7: #{tpu_custom_call.1} parent=1 // loop_footer_branch
      %24 = sbr.rel target = $region3
    $region8: #{tpu_custom_call.1} parent=1 // loop_exit
      _
    %1094 = vsyncpa [#allocation6], 1
    %s1095 = scalar_lea.sflag [#allocation6], 1
    %1096 = vsyncpa %s1095, 1
    %1097 = vsyncpa [#allocation9], 1
    %s1098 = scalar_lea.sflag [#allocation9], 1
    %1099 = vsyncpa %s1098, 1
    %1100 = vsyncpa [#allocation12], 1
    %1101 = vsyncpa [#allocation7], 1
    %s1102 = scalar_lea.sflag [#allocation7], 1
    %1103 = vsyncpa %s1102, 1
    %1104 = vsyncpa [#allocation15], 1
    %s1105 = scalar_lea.sflag [#allocation15], 1
    %1106 = vsyncpa %s1105, 1

</llo_original>
